<compile_context>
chip_gen: v5e
topology: v5e:2x2
jax: 0.10.0
libtpu: 0.0.40
codegen_flags: <defaults>
</compile_context>

<pallas_src>
import jax
import jax.numpy as jnp
from jax.experimental import pallas as pl
from jax.experimental.pallas import tpu as pltpu


# ----------------------------------------------------------------------------
# Helpers.
# ----------------------------------------------------------------------------
def _round_up(v: int, m: int) -> int:
    return ((v + m - 1) // m) * m


def _choose_feature_tiles(h_in: int, h_out: int,
                          *, tk_cap: int = 512, tn_cap: int = 512):
    """Lane-dense (multiples of 128) K/N tiles, clamped to the problem."""
    tk = min(tk_cap, _round_up(h_in, 128))
    tn = min(tn_cap, _round_up(h_out, 128))
    return tk, tn


# ----------------------------------------------------------------------------
# Tiled Pallas kernel: y = x @ W + b, f32 accumulation directly in o_ref.
# ----------------------------------------------------------------------------
def _dense_kernel(x_ref, w_ref, b_ref, o_ref):
    # o_ref's block index (i, j) is invariant across the k axis, so the f32
    # output tile is resident in VMEM for the whole reduction: initialize it
    # with the bias on the first k step, then accumulate MXU partials into it.
    @pl.when(pl.program_id(2) == 0)
    def _():
        o_ref[...] = jnp.broadcast_to(b_ref[...], o_ref.shape)

    o_ref[...] += jnp.dot(
        x_ref[...], w_ref[...], preferred_element_type=jnp.float32)


def dense_pallas(x: jax.Array, w_padded: jax.Array, b_padded: jax.Array,
                 *, h_out: int, tk: int, tn: int, tm_cap: int = 256,
                 compute_dtype=jnp.bfloat16) -> jax.Array:
    """y = x @ W + b via a tiled Pallas TPU matmul.

    x:        [B, H_in]            float32 (cast to bf16 for the MXU here).
    w_padded: [Kp, Np]             compute_dtype, pre-cast + pre-padded.
    b_padded: [1, Np]              float32,        pre-padded.
    Returns   [B, h_out]           float32 (f32 accumulation end-to-end).
    """
    B, h_in = x.shape
    Kp, Np = w_padded.shape
    assert Kp % tk == 0 and Np % tn == 0

    # Shape-adaptive M tile: multiple of 16 (bf16 sublane packing), capped.
    tm = min(tm_cap, _round_up(B, 16))

    xp = x.astype(compute_dtype)
    pad_m = _round_up(B, tm) - B
    pad_k = Kp - h_in
    if pad_m or pad_k:
        xp = jnp.pad(xp, ((0, pad_m), (0, pad_k)))
    Mp = xp.shape[0]

    grid_m, grid_n, grid_k = Mp // tm, Np // tn, Kp // tk
    grid = (grid_m, grid_n, grid_k)

    # Advisory cost: count the *actual* HBM traffic (x is re-read once per N
    # tile, W once per M tile); output written once (resident across k).
    cost = pl.CostEstimate(
        flops=2 * Mp * Kp * Np,
        transcendentals=0,
        bytes_accessed=(xp.size * xp.dtype.itemsize * grid_n
                        + w_padded.size * w_padded.dtype.itemsize * grid_m
                        + b_padded.size * b_padded.dtype.itemsize * grid_m
                        + Mp * Np * 4),
    )

    out = pl.pallas_call(
        _dense_kernel,
        out_shape=jax.ShapeDtypeStruct((Mp, Np), jnp.float32),
        grid_spec=pltpu.PrefetchScalarGridSpec(
            num_scalar_prefetch=0,
            grid=grid,
            in_specs=[
                pl.BlockSpec((tm, tk), lambda i, j, k: (i, k)),
                pl.BlockSpec((tk, tn), lambda i, j, k: (k, j)),
                pl.BlockSpec((1, tn), lambda i, j, k: (0, j)),
            ],
            out_specs=pl.BlockSpec((tm, tn), lambda i, j, k: (i, j)),
        ),
        compiler_params=pltpu.CompilerParams(
            dimension_semantics=("parallel", "parallel", "arbitrary"),
        ),
        cost_estimate=cost,
    )(xp, w_padded, b_padded)

    # Strip padding back to the requested output shape.
    return out[:B, :h_out]


# ----------------------------------------------------------------------------
# The actual module being translated: a pure delegating wrapper.
# ----------------------------------------------------------------------------
class JitTraceExportWrapper:
    """JAX equivalent of brevitas' _JitTraceExportWrapper.

    forward(*args, **kwargs) delegates verbatim to the wrapped callable —
    no shape, dtype, or value changes are introduced by the wrapper itself.
    """

    def __init__(self, model_to_trace):
        self.fn_to_trace = lambda *args, **kwargs: model_to_trace(*args, **kwargs)

    def __call__(self, *args, **kwargs):
        return self.fn_to_trace(*args, **kwargs)

    forward = __call__


# ----------------------------------------------------------------------------
# A concrete "model_to_trace" whose forward runs on the Pallas kernel.
# ----------------------------------------------------------------------------
class TinyDenseModel:
    def __init__(self, hidden_in: int, hidden_out: int, key: jax.Array,
                 *, compute_dtype=jnp.bfloat16):
        kw, kb = jax.random.split(key)
        self.w = jax.random.normal(kw, (hidden_in, hidden_out), jnp.float32) * 0.05
        self.b = jax.random.normal(kb, (1, hidden_out), jnp.float32) * 0.01
        self.h_out = hidden_out

        # Hoist the per-call weight/bias cast + pad out of the hot path: the
        # kernel sees W pre-cast to bf16 and pre-padded to tile multiples.
        self.tk, self.tn = _choose_feature_tiles(hidden_in, hidden_out)
        kp = _round_up(hidden_in, self.tk)
        np_ = _round_up(hidden_out, self.tn)
        self.wp = jnp.pad(self.w.astype(compute_dtype),
                          ((0, kp - hidden_in), (0, np_ - hidden_out)))
        self.bp = jnp.pad(self.b.astype(jnp.float32),
                          ((0, 0), (0, np_ - hidden_out)))

    def __call__(self, x):
        return dense_pallas(x, self.wp, self.bp,
                            h_out=self.h_out, tk=self.tk, tn=self.tn)


if __name__ == "__main__":
    key = jax.random.PRNGKey(0)
    k_model, k_x, k_x2 = jax.random.split(key, 3)

    # Small demo shapes; shape-adaptive tiling turns this into a (1, 1, 1)
    # grid with lane-dense tiles, so the Pallas path runs without overhead.
    B, H_in, H_out = 8, 256, 128
    model = TinyDenseModel(H_in, H_out, k_model)
    wrapper = JitTraceExportWrapper(model)

    x = jax.random.normal(k_x, (B, H_in), jnp.float32)

    # Wrapper forward == wrapped model forward (pass-through semantics).
    y = jax.block_until_ready(wrapper(x))
    y_direct = jax.block_until_ready(model(x))

    # Reference computed with the same bf16 input cast (accumulation in f32),
    # so the only discrepancy is MXU accumulation order.
    xb = x.astype(jnp.bfloat16).astype(jnp.float32)
    wb = model.w.astype(jnp.bfloat16).astype(jnp.float32)
    y_ref = xb @ wb + model.b

    assert y.shape == (B, H_out) and y.dtype == jnp.float32
    assert jnp.array_equal(y, y_direct)
    assert jnp.allclose(y, y_ref, atol=2e-3, rtol=2e-3)

    # Second check: non-tile-aligned features + a multi-step K reduction
    # (640 -> Kp=1024, two k steps) to exercise padding and accumulation.
    B2, H_in2, H_out2 = 64, 640, 320
    model2 = TinyDenseModel(H_in2, H_out2, k_model)
    wrapper2 = JitTraceExportWrapper(model2)
    x2 = jax.random.normal(k_x2, (B2, H_in2), jnp.float32)
    y2 = jax.block_until_ready(wrapper2(x2))

    xb2 = x2.astype(jnp.bfloat16).astype(jnp.float32)
    wb2 = model2.w.astype(jnp.bfloat16).astype(jnp.float32)
    y2_ref = xb2 @ wb2 + model2.b
    assert y2.shape == (B2, H_out2) and y2.dtype == jnp.float32
    assert jnp.allclose(y2, y2_ref, atol=3e-3, rtol=3e-3)

    print("KERNEL_OK")
</pallas_src>

<mosaic_0001>
module attributes {stable_mosaic.version = 11 : i64} {
  func.func @_dense_kernel(%arg0: i32, %arg1: i32, %arg2: i32, %arg3: memref<16x256xbf16, #tpu.memory_space<vmem>>, %arg4: memref<256x128xbf16, #tpu.memory_space<vmem>>, %arg5: memref<1x128xf32, #tpu.memory_space<vmem>>, %arg6: memref<16x128xf32, #tpu.memory_space<vmem>>) attributes {dimension_semantics = [#tpu.dimension_semantics<parallel>, #tpu.dimension_semantics<parallel>, #tpu.dimension_semantics<arbitrary>], iteration_bounds = array<i64: 1, 1, 1>, scalar_prefetch = 0 : i64, scratch_operands = 0 : i64, tpu.core_type = #tpu.core_type<tc>, window_params = [{transform_indices = @transform_0, window_bounds = array<i64: 16, 256>}, {transform_indices = @transform_1, window_bounds = array<i64: 256, 128>}, {transform_indices = @transform_2, window_bounds = array<i64: 1, 128>}, {transform_indices = @transform_3, window_bounds = array<i64: 16, 128>}]} {
    %c0_i32 = arith.constant 0 : i32
    %0 = arith.cmpi eq, %arg2, %c0_i32 : i32
    %1 = arith.extui %0 : i1 to i32
    %c0_i32_0 = arith.constant 0 : i32
    %2 = arith.cmpi ne, %1, %c0_i32_0 : i32
    scf.if %2 {
      %c0_8 = arith.constant 0 : index
      %c0_9 = arith.constant 0 : index
      %9 = vector.load %arg5[%c0_8, %c0_9] : memref<1x128xf32, #tpu.memory_space<vmem>>, vector<1x128xf32>
      %10 = vector.shape_cast %9 : vector<1x128xf32> to vector<1x128xf32>
      %11 = vector.broadcast %10 : vector<1x128xf32> to vector<16x128xf32>
      %c0_10 = arith.constant 0 : index
      %c0_11 = arith.constant 0 : index
      %12 = vector.load %arg6[%c0_10, %c0_11] : memref<16x128xf32, #tpu.memory_space<vmem>>, vector<16x128xf32>
      tpu.vector_store %arg6[%c0_10, %c0_11], %11 {strides = array<i32>} : memref<16x128xf32, #tpu.memory_space<vmem>>, vector<16x128xf32>,
    } else {
    }
    %c0 = arith.constant 0 : index
    %c0_1 = arith.constant 0 : index
    %3 = vector.load %arg6[%c0, %c0_1] : memref<16x128xf32, #tpu.memory_space<vmem>>, vector<16x128xf32>
    %c0_2 = arith.constant 0 : index
    %c0_3 = arith.constant 0 : index
    %4 = vector.load %arg3[%c0_2, %c0_3] : memref<16x256xbf16, #tpu.memory_space<vmem>>, vector<16x256xbf16>
    %c0_4 = arith.constant 0 : index
    %c0_5 = arith.constant 0 : index
    %5 = vector.load %arg4[%c0_4, %c0_5] : memref<256x128xbf16, #tpu.memory_space<vmem>>, vector<256x128xbf16>
    %cst = arith.constant dense<0.000000e+00> : vector<16x128xf32>
    %6 = tpu.matmul %4, %5, %cst {dimension_numbers = #tpu.dot_dimension_numbers<[1], [0], [0], [1], [0, 0, 1, 1], [], []>} : vector<16x256xbf16>, vector<256x128xbf16>, vector<16x128xf32> -> vector<16x128xf32>
    %7 = arith.addf %3, %6 : vector<16x128xf32>
    %c0_6 = arith.constant 0 : index
    %c0_7 = arith.constant 0 : index
    %8 = vector.load %arg6[%c0_6, %c0_7] : memref<16x128xf32, #tpu.memory_space<vmem>>, vector<16x128xf32>
    tpu.vector_store %arg6[%c0_6, %c0_7], %7 {strides = array<i32>} : memref<16x128xf32, #tpu.memory_space<vmem>>, vector<16x128xf32>,
    return
  }
  func.func @transform_0(%arg0: i32, %arg1: i32, %arg2: i32) -> (i32, i32) {
    %c0_i32 = arith.constant 0 : i32
    return %arg0, %arg2 : i32, i32
  }
  func.func @transform_1(%arg0: i32, %arg1: i32, %arg2: i32) -> (i32, i32) {
    %c0_i32 = arith.constant 0 : i32
    return %arg2, %arg1 : i32, i32
  }
  func.func @transform_2(%arg0: i32, %arg1: i32, %arg2: i32) -> (i32, i32) {
    %c0_i32 = arith.constant 0 : i32
    %c0_i32_0 = arith.constant 0 : i32
    return %c0_i32, %arg1 : i32, i32
  }
  func.func @transform_3(%arg0: i32, %arg1: i32, %arg2: i32) -> (i32, i32) {
    %c0_i32 = arith.constant 0 : i32
    return %arg0, %arg1 : i32, i32
  }
}

</mosaic_0001>

<llo_original>
// kernel: tpu_custom_call.1
$region0: #{tpu_custom_call.1}
  #allocation0 [shape = 'u32[]', space=smem, size = 0x4, offset = 0x4, fixed_abs, tag = 'smem constant byte address 0x4 - core index']
  #allocation1 [shape = 'u32[72,128]{1,0:T(1,128)}', space=vmem, size = 0x9000, scoped, tag = 'internal scratch']
  %s0 = inlined_call_operand.hbm [shape: bf16[16,256], index: 0, kind: input, shape index: {}]
  %s1 = inlined_call_operand.hbm [shape: bf16[256,128], index: 1, kind: input, shape index: {}]
  %s2 = inlined_call_operand.vmem [shape: f32[1,128], index: 2, kind: input, shape index: {}]
  %s3 = inlined_call_operand.hbm [shape: f32[16,128], index: 3, kind: output, shape index: {}]
  %s4 = sld [smem:[#allocation0]]
  $region34: #{tpu_custom_call.1} parent=0
    _
  %s6 = ssub.s32 1, %s4
  %s7 = scalar_select 0, %s6, %s4
  $region1: #{tpu_custom_call.1} parent=0
    #allocation2 [shape = 'u8[8192]{0}', space=vmem, size = 0x2000, scoped, tag = 'input window, operand 0, single buffered']
    #allocation3 [shape = 's32[1]{0}', space=sflag, size = 0x4, scoped, tag = 'scoped memory for tpu_custom_call.1']
    #allocation4 [shape = 's32[1]{0}', space=sflag, size = 0x4, scoped, tag = 'scoped memory for tpu_custom_call.1']
    #allocation5 [shape = 'u8[65536]{0}', space=vmem, size = 0x10000, scoped, tag = 'input window, operand 1, single buffered']
    #allocation6 [shape = 's32[1]{0}', space=sflag, size = 0x4, scoped, tag = 'scoped memory for tpu_custom_call.1']
    #allocation7 [shape = 'u8[8192]{0}', space=vmem, size = 0x2000, scoped, tag = 'output window, operand 0, single buffered']
    %8 = vsyncpa [#allocation3], 0
    %9 = vsyncpa [#allocation6], 0
    %10 = vsyncpa [#allocation4], 0
    // Predicated region
    $region2: #{tpu_custom_call.1} parent=1 // pred_check
      _
    $region3: #{tpu_custom_call.1} parent=1 // pred_check_branch
      %12 = sbr.rel (0) target = $region5
    $region4: #{tpu_custom_call.1} parent=1 // pred_region
      %14 = vsyncadd [#allocation3], 0
      %s15 = sshll.u32 %s0, 4
      %s16 = int_to_ptr.hbm [resolvable:$true] %s15
      %s17 = sshll.u32 [#allocation2], 4
      %s18 = int_to_ptr.vmem [resolvable:$true] %s17
      %23 = dma.hbm_to_vmem [thread:$0]  %s16, 256, %s18, [#allocation3], 128, 128, 8
    $region5: #{tpu_custom_call.1} parent=1 // pred_fallthru
      _
    // Predicated region
    $region6: #{tpu_custom_call.1} parent=1 // pred_check
      _
    $region7: #{tpu_custom_call.1} parent=1 // pred_check_branch
      %25 = sbr.rel (0) target = $region9
    $region8: #{tpu_custom_call.1} parent=1 // pred_region
      %27 = vsyncadd [#allocation6], 0
      %s28 = sshll.u32 %s1, 4
      %s29 = int_to_ptr.hbm [resolvable:$true] %s28
      %s30 = sshll.u32 [#allocation5], 4
      %s31 = int_to_ptr.vmem [resolvable:$true] %s30
      %36 = dma.hbm_to_vmem [thread:$0]  %s29, 2048, %s31, [#allocation6], 64, 64, 4
    $region9: #{tpu_custom_call.1} parent=1 // pred_fallthru
      _
    // Predicated region
    $region10: #{tpu_custom_call.1} parent=1 // pred_check
      _
    $region11: #{tpu_custom_call.1} parent=1 // pred_check_branch
      %38 = sbr.rel (0) target = $region13
    $region12: #{tpu_custom_call.1} parent=1 // pred_region
      _
    $region13: #{tpu_custom_call.1} parent=1 // pred_fallthru
      _
    // Predicated region
    $region14: #{tpu_custom_call.1} parent=1 // pred_check
      _
    $region15: #{tpu_custom_call.1} parent=1 // pred_check_branch
      %40 = sbr.rel (0) target = $region17
    $region16: #{tpu_custom_call.1} parent=1 // pred_region
      %42 = dma.done [#allocation3], 256
    $region17: #{tpu_custom_call.1} parent=1 // pred_fallthru
      _
    // Predicated region
    $region18: #{tpu_custom_call.1} parent=1 // pred_check
      _
    $region19: #{tpu_custom_call.1} parent=1 // pred_check_branch
      %44 = sbr.rel (0) target = $region21
    $region20: #{tpu_custom_call.1} parent=1 // pred_region
      %46 = dma.done [#allocation6], 2048
    $region21: #{tpu_custom_call.1} parent=1 // pred_fallthru
      _
    %p47 = scmp.eq.s32.totalorder 0, 0
    // Predicated region
    $region22: #{tpu_custom_call.1} parent=1 // pred_check
      %p48 = pneg %p47
    $region23: #{tpu_custom_call.1} parent=1 // pred_check_branch
      %50 = sbr.rel (%p48) target = $region25
    $region24: #{tpu_custom_call.1} parent=1 // pred_region
      %v51 = vld [vmem:[%s2] sm:$0x1]
      %v53 = vperm.slane %v51, 0
      %55 = vst [vmem:[#allocation7] sm:$0xff] %v53
      %56 = vst [vmem:[#allocation7 + $0x8] sm:$0xff] %v53
    $region25: #{tpu_custom_call.1} parent=1 // pred_fallthru
      _
    %v57 = vld [vmem:[#allocation7] sm:$0xff]
    %v58 = vld [vmem:[#allocation7 + $0x8] sm:$0xff]
    %v59 = vld [vmem:[#allocation2] sm:$0xff]
    %v60 = vld [vmem:[#allocation2 + $0x8] sm:$0xff]
    %v61 = vld [vmem:[#allocation5] sm:$0xf]
    %v62 = vld [vmem:[#allocation5 + $0x4] sm:$0xf]
    %v63 = vld [vmem:[#allocation5 + $0x8] sm:$0xf]
    %v64 = vld [vmem:[#allocation5 + $0xc] sm:$0xf]
    %v65 = vld [vmem:[#allocation5 + $0x10] sm:$0xf]
    %v66 = vld [vmem:[#allocation5 + $0x14] sm:$0xf]
    %v67 = vld [vmem:[#allocation5 + $0x18] sm:$0xf]
    %v68 = vld [vmem:[#allocation5 + $0x1c] sm:$0xf]
    %v69 = vld [vmem:[#allocation5 + $0x20] sm:$0xf]
    %v70 = vld [vmem:[#allocation5 + $0x24] sm:$0xf]
    %v71 = vld [vmem:[#allocation5 + $0x28] sm:$0xf]
    %v72 = vld [vmem:[#allocation5 + $0x2c] sm:$0xf]
    %v73 = vld [vmem:[#allocation5 + $0x30] sm:$0xf]
    %v74 = vld [vmem:[#allocation5 + $0x34] sm:$0xf]
    %v75 = vld [vmem:[#allocation5 + $0x38] sm:$0xf]
    %v76 = vld [vmem:[#allocation5 + $0x3c] sm:$0xf]
    %v77 = vld [vmem:[#allocation5 + $0x40] sm:$0xf]
    %v78 = vld [vmem:[#allocation5 + $0x44] sm:$0xf]
    %v79 = vld [vmem:[#allocation5 + $0x48] sm:$0xf]
    %v80 = vld [vmem:[#allocation5 + $0x4c] sm:$0xf]
    %v81 = vld [vmem:[#allocation5 + $0x50] sm:$0xf]
    %v82 = vld [vmem:[#allocation5 + $0x54] sm:$0xf]
    %v83 = vld [vmem:[#allocation5 + $0x58] sm:$0xf]
    %v84 = vld [vmem:[#allocation5 + $0x5c] sm:$0xf]
    %v85 = vld [vmem:[#allocation5 + $0x60] sm:$0xf]
    %v86 = vld [vmem:[#allocation5 + $0x64] sm:$0xf]
    %v87 = vld [vmem:[#allocation5 + $0x68] sm:$0xf]
    %v88 = vld [vmem:[#allocation5 + $0x6c] sm:$0xf]
    %v89 = vld [vmem:[#allocation5 + $0x70] sm:$0xf]
    %v90 = vld [vmem:[#allocation5 + $0x74] sm:$0xf]
    %v91 = vld [vmem:[#allocation5 + $0x78] sm:$0xf]
    %v92 = vld [vmem:[#allocation5 + $0x7c] sm:$0xf]
    %v95 = vunpack.c.l.b16 %v59
    %v96 = vunpack.c.h.b16 %v59
    %v97 = vunpack.c.l.b16 %v60
    %v98 = vunpack.c.h.b16 %v60
    %v99 = vpack.c.b16 %v97, %v95
    %v100 = vpack.c.b16 %v98, %v96
    %v135 = vunpack.c.l.b16 %v61
    %v136 = vunpack.c.l.b16 %v62
    %v137 = vunpack.c.l.b16 %v63
    %v138 = vunpack.c.l.b16 %v64
    %v139 = vunpack.c.l.b16 %v65
    %v140 = vunpack.c.l.b16 %v66
    %v141 = vunpack.c.l.b16 %v67
    %v142 = vunpack.c.l.b16 %v68
    %v143 = vunpack.c.l.b16 %v69
    %v144 = vunpack.c.l.b16 %v70
    %v145 = vunpack.c.l.b16 %v71
    %v146 = vunpack.c.l.b16 %v72
    %v147 = vunpack.c.l.b16 %v73
    %v148 = vunpack.c.l.b16 %v74
    %v149 = vunpack.c.l.b16 %v75
    %v150 = vunpack.c.l.b16 %v76
    %v151 = vunpack.c.l.b16 %v77
    %v152 = vunpack.c.l.b16 %v78
    %v153 = vunpack.c.l.b16 %v79
    %v154 = vunpack.c.l.b16 %v80
    %v155 = vunpack.c.l.b16 %v81
    %v156 = vunpack.c.l.b16 %v82
    %v157 = vunpack.c.l.b16 %v83
    %v158 = vunpack.c.l.b16 %v84
    %v159 = vunpack.c.l.b16 %v85
    %v160 = vunpack.c.l.b16 %v86
    %v161 = vunpack.c.l.b16 %v87
    %v162 = vunpack.c.l.b16 %v88
    %v163 = vunpack.c.l.b16 %v89
    %v164 = vunpack.c.l.b16 %v90
    %v165 = vunpack.c.l.b16 %v91
    %v166 = vunpack.c.l.b16 %v92
    %v167 = vpack.c.b16 %v136, %v135
    %v168 = vpack.c.b16 %v138, %v137
    %v169 = vpack.c.b16 %v140, %v139
    %v170 = vpack.c.b16 %v142, %v141
    %v171 = vpack.c.b16 %v144, %v143
    %v172 = vpack.c.b16 %v146, %v145
    %v173 = vpack.c.b16 %v148, %v147
    %v174 = vpack.c.b16 %v150, %v149
    %v175 = vpack.c.b16 %v152, %v151
    %v176 = vpack.c.b16 %v154, %v153
    %v177 = vpack.c.b16 %v156, %v155
    %v178 = vpack.c.b16 %v158, %v157
    %v179 = vpack.c.b16 %v160, %v159
    %v180 = vpack.c.b16 %v162, %v161
    %v181 = vpack.c.b16 %v164, %v163
    %v182 = vpack.c.b16 %v166, %v165
    %199 = vmatpush.bf16.msra.mxu0 %v174
    %200 = vmatpush.bf16.msra.mxu0 %v173
    %201 = vmatpush.bf16.msra.mxu0 %v172
    %202 = vmatpush.bf16.msra.mxu0 %v171
    %203 = vmatpush.bf16.msra.mxu0 %v170
    %204 = vmatpush.bf16.msra.mxu0 %v169
    %205 = vmatpush.bf16.msra.mxu0 %v168
    %206 = vmatpush.bf16.msra.mxu0 %v167
    %207 = vmatmul.bf16.gmra.mxu0 %v99
    %v208 = vpop.f32.mrf.mxu0
    %v209 = vadd.f32 0.0, %v208
    %v210 = vpop.f32.mrf.mxu0
    %v211 = vadd.f32 0.0, %v210
    %212 = vdwg.mxu0
    %213 = vmatpush.bf16.msra.mxu0 %v182
    %214 = vmatpush.bf16.msra.mxu0 %v181
    %215 = vmatpush.bf16.msra.mxu0 %v180
    %216 = vmatpush.bf16.msra.mxu0 %v179
    %217 = vmatpush.bf16.msra.mxu0 %v178
    %218 = vmatpush.bf16.msra.mxu0 %v177
    %219 = vmatpush.bf16.msra.mxu0 %v176
    %220 = vmatpush.bf16.msra.mxu0 %v175
    %221 = vmatmul.bf16.gmra.mxu0 %v100
    %v222 = vpop.f32.mrf.mxu0
    %v223 = vadd.f32 %v209, %v222
    %v224 = vpop.f32.mrf.mxu0
    %v225 = vadd.f32 %v211, %v224
    %226 = vdwg.mxu0
    %v227 = vadd.f32 %v57, %v223
    %v228 = vadd.f32 %v58, %v225
    %229 = vst [vmem:[#allocation7] sm:$0xff] %v227
    %230 = vst [vmem:[#allocation7 + $0x8] sm:$0xff] %v228
    // Predicated region
    $region26: #{tpu_custom_call.1} parent=1 // pred_check
      _
    $region27: #{tpu_custom_call.1} parent=1 // pred_check_branch
      %232 = sbr.rel (0) target = $region29
    $region28: #{tpu_custom_call.1} parent=1 // pred_region
      %234 = vsyncadd [#allocation4], 0
      %s235 = sshll.u32 [#allocation7], 4
      %s236 = int_to_ptr.vmem [resolvable:$true] %s235
      %s237 = sshll.u32 %s3, 4
      %s238 = int_to_ptr.hbm [resolvable:$true] %s237
      %243 = dma.vmem_to_hbm [thread:$0]  %s236, 256, %s238, [#allocation4], 128, 128, 8
    $region29: #{tpu_custom_call.1} parent=1 // pred_fallthru
      _
    // Predicated region
    $region30: #{tpu_custom_call.1} parent=1 // pred_check
      _
    $region31: #{tpu_custom_call.1} parent=1 // pred_check_branch
      %245 = sbr.rel (0) target = $region33
    $region32: #{tpu_custom_call.1} parent=1 // pred_region
      %247 = dma.done [#allocation4], 256
    $region33: #{tpu_custom_call.1} parent=1 // pred_fallthru
      _
    %248 = vsyncpa [#allocation3], 1
    %249 = vsyncpa [#allocation6], 1
    %250 = vsyncpa [#allocation4], 1

</llo_original>
